<compile_context>
chip_gen: v6e
topology: v6e:2x2x1
jax: 0.10.0
libtpu: 0.0.40
codegen_flags: <defaults>
</compile_context>

<pallas_src>
import jax
import jax.numpy as jnp
from jax import lax
from jax.experimental import pallas as pl
from jax.experimental.pallas import tpu as pltpu

LANES = 128
SIDE = 8                 # packed per-row sidecar width (lane0 = target, lane1 = w_row)
TILE_R_MAX = 2048        # ~1 MiB/block at C=128 f32; double-buffered ~2 MiB
MXU_DENOM_MIN_C = 32     # use the MXU ones-matmul only when the class dim is big enough


def _round_up(x, m):
    return ((x + m - 1) // m) * m


# ---------------------------------------------------------------------------
# Fused kernel: weighted cross-entropy partials + matched-box L1 / GIoU sums
# ---------------------------------------------------------------------------
def _make_fused_kernel(num_classes_p1, num_matched, tile_r, num_rows):
    C = int(num_classes_p1)          # num_classes + 1 (full, un-padded class dim)
    N = int(num_matched)             # number of matched boxes (static)
    R = int(num_rows)                # real number of rows (for tail masking)
    use_mxu_denom = C >= MXU_DENOM_MIN_C

    def kernel(logits_ref, side_ref, boxes_ref, out_ref):
        i = pl.program_id(0)

        # ----- weighted cross-entropy partial sums over this row tile -------
        x = logits_ref[...].astype(jnp.float32)               # (tile_r, C)
        tgt = side_ref[:, 0:1]                                 # (tile_r, 1) f32 class id
        w_row = side_ref[:, 1:2]                               # (tile_r, 1) f32 CE weight

        # The last tile may read past R (partial block).  Mask with selects so
        # garbage / NaN rows can never pollute the partial sums.
        g_row = lax.broadcasted_iota(jnp.int32, (tile_r, 1), 0) + i * tile_r
        row_ok = g_row < R                                     # (tile_r, 1) bool

        col = lax.broadcasted_iota(jnp.int32, (tile_r, C), 1)
        sel = jnp.logical_and(col == tgt.astype(jnp.int32), row_ok)   # in-kernel one-hot

        # log-sum-exp: the row max is the only per-row XLU lane reduce we keep.
        m = jnp.max(x, axis=-1, keepdims=True)                 # (tile_r, 1)   XLU
        p = jnp.exp(x - m)                                     # (tile_r, C)   EUP
        if use_mxu_denom:
            # Row sums on the idle MXU (f32 accumulate, exact enough); lane 0
            # of the product is the per-row sum.
            ones = jnp.ones((C, LANES), jnp.float32)
            denom = jnp.dot(p, ones, preferred_element_type=jnp.float32)[:, 0:1]
        else:
            denom = jnp.sum(p, axis=-1, keepdims=True)         # tiny C: cheap XLU reduce
        lse = m + jnp.log(denom)                               # (tile_r, 1)

        # Aggregate rows-first (VPU adds across row-vregs), then one lane
        # reduce per tile — not one per row.
        wlse = jnp.where(row_ok, w_row * lse, 0.0)             # (tile_r, 1)
        wvalid = jnp.where(row_ok, w_row, 0.0)                 # (tile_r, 1)
        t_contrib = jnp.where(sel, w_row * x, 0.0)             # (tile_r, C)
        t_row = jnp.sum(t_contrib, axis=0, keepdims=True)      # (1, C)

        ce_sum = (jnp.sum(wlse, axis=0, keepdims=True)
                  - jnp.sum(t_row, axis=-1, keepdims=True))    # (1, 1)
        w_sum = jnp.sum(wvalid, axis=0, keepdims=True)         # (1, 1)

        out_lane = lax.broadcasted_iota(jnp.int32, (8, LANES), 1)
        out_sub = lax.broadcasted_iota(jnp.int32, (8, LANES), 0)
        first_sub = out_sub == 0
        out_ref[...] = (jnp.where(jnp.logical_and(first_sub, out_lane == 0), ce_sum, 0.0)
                        + jnp.where(jnp.logical_and(first_sub, out_lane == 1), w_sum, 0.0))

        # ----- matched-box L1 + GIoU: only computed on the first tile -------
        @pl.when(i == 0)
        def _():
            b = boxes_ref[...]                                  # (8, 128) f32
            lane = lax.broadcasted_iota(jnp.int32, (1, LANES), 1)
            bm = lane < N                                       # (1, 128) validity (bool)

            scx, scy, sw, sh = b[0:1], b[1:2], b[2:3], b[3:4]
            tcx, tcy, tw, th = b[4:5], b[5:6], b[6:7], b[7:8]

            l1 = (jnp.abs(scx - tcx) + jnp.abs(scy - tcy)
                  + jnp.abs(sw - tw) + jnp.abs(sh - th))
            l1_sum = jnp.sum(jnp.where(bm, l1, 0.0), axis=-1, keepdims=True)

            sx0, sy0 = scx - 0.5 * sw, scy - 0.5 * sh
            sx1, sy1 = scx + 0.5 * sw, scy + 0.5 * sh
            tx0, ty0 = tcx - 0.5 * tw, tcy - 0.5 * th
            tx1, ty1 = tcx + 0.5 * tw, tcy + 0.5 * th
            area_s = (sx1 - sx0) * (sy1 - sy0)
            area_t = (tx1 - tx0) * (ty1 - ty0)

            ix0 = jnp.maximum(sx0, tx0)
            iy0 = jnp.maximum(sy0, ty0)
            ix1 = jnp.minimum(sx1, tx1)
            iy1 = jnp.minimum(sy1, ty1)
            inter = jnp.maximum(ix1 - ix0, 0.0) * jnp.maximum(iy1 - iy0, 0.0)
            union = area_s + area_t - inter
            iou = inter / jnp.where(bm, union, 1.0)

            ex0 = jnp.minimum(sx0, tx0)
            ey0 = jnp.minimum(sy0, ty0)
            ex1 = jnp.maximum(sx1, tx1)
            ey1 = jnp.maximum(sy1, ty1)
            area_c = (ex1 - ex0) * (ey1 - ey0)
            giou = iou - (area_c - union) / jnp.where(bm, area_c, 1.0)
            giou_sum = jnp.sum(jnp.where(bm, 1.0 - giou, 0.0), axis=-1, keepdims=True)

            out_ref[...] = (out_ref[...]
                            + jnp.where(jnp.logical_and(first_sub, out_lane == 2), l1_sum, 0.0)
                            + jnp.where(jnp.logical_and(first_sub, out_lane == 3), giou_sum, 0.0))

    return kernel


def detr_losses_fused(logits2d, target_classes, empty_weight, src_boxes, target_boxes):
    """Fused DETR losses.

    logits2d:       (R, C) model logits (any float dtype; upcast in-kernel)
    target_classes: (R,)   int target class per query
    empty_weight:   (C,)   per-class CE weight
    src_boxes:      (N, 4) matched predicted boxes, cxcywh
    target_boxes:   (N, 4) matched target boxes, cxcywh

    Returns (loss_ce, l1_sum, giou_loss_sum).
    """
    R, C = logits2d.shape
    N = int(src_boxes.shape[0])
    # TODO(synk): add a lane-chunk grid to support > 128 matched boxes.
    assert N <= LANES, "kernel supports up to 128 matched boxes"

    # Packed per-row sidecar: lane 0 = target class (exact as f32), lane 1 =
    # per-row CE weight.  One tiny XLA gather here removes a full cross-lane
    # reduce per row inside the kernel.
    target_classes = target_classes.astype(jnp.int32)
    w_row = empty_weight.astype(jnp.float32)[target_classes]
    side = jnp.zeros((R, SIDE), jnp.float32)
    side = side.at[:, 0].set(target_classes.astype(jnp.float32))
    side = side.at[:, 1].set(w_row)

    # Single (8, 128) box block: sublanes 0-3 = src, 4-7 = tgt (cxcywh).
    boxes_p = jnp.zeros((8, LANES), jnp.float32)
    if N > 0:
        boxes_p = boxes_p.at[0:4, :N].set(src_boxes.astype(jnp.float32).T)
        boxes_p = boxes_p.at[4:8, :N].set(target_boxes.astype(jnp.float32).T)

    # Tiling: >= 2 tiles whenever R allows (v7x dual TensorCores share the
    # "parallel" axis), sublane-aligned to the logits dtype, capped so the
    # double-buffered logits block stays well inside scoped VMEM.
    itemsize = jnp.dtype(logits2d.dtype).itemsize
    sub = {4: 8, 2: 16, 1: 32}.get(itemsize, 8)
    tile_r = _round_up(max(pl.cdiv(R, 2), 1), sub)
    vmem_rows = max(sub, ((4 << 20) // max(itemsize * C, 1)) // sub * sub)
    tile_r = max(sub, min(tile_r, TILE_R_MAX, vmem_rows))
    num_tiles = pl.cdiv(R, tile_r)

    kernel = _make_fused_kernel(C, N, tile_r, R)
    partials = pl.pallas_call(
        kernel,
        out_shape=jax.ShapeDtypeStruct((num_tiles * 8, LANES), jnp.float32),
        grid=(num_tiles,),
        in_specs=[
            pl.BlockSpec((tile_r, C), lambda i: (i, 0)),      # un-padded logits tile
            pl.BlockSpec((tile_r, SIDE), lambda i: (i, 0)),   # packed per-row sidecar
            pl.BlockSpec((8, LANES), lambda i: (0, 0)),       # packed matched boxes
        ],
        out_specs=pl.BlockSpec((8, LANES), lambda i: (i, 0)), # lane-dense partials
        compiler_params=pltpu.CompilerParams(
            dimension_semantics=("parallel",),
            vmem_limit_bytes=32 * 1024 * 1024),               # explicit for v5e (16 MiB default)
    )(logits2d, side, boxes_p)

    totals = jnp.sum(partials, axis=0)                         # (128,)
    # Weighted mean (divide by sum of per-sample weights) == torch
    # F.cross_entropy(weight=..., reduction='mean').
    loss_ce = totals[0] / totals[1]
    return loss_ce, totals[2], totals[3]


# ---------------------------------------------------------------------------
# SetCriterion (JAX / Pallas version)
# ---------------------------------------------------------------------------
class IdentityMatcher:
    """Deterministic matcher: target j in image b is matched to query j."""

    def __call__(self, outputs, targets):
        return [(jnp.arange(len(t["labels"]), dtype=jnp.int32),
                 jnp.arange(len(t["labels"]), dtype=jnp.int32)) for t in targets]


class SetCriterion:
    def __init__(self, num_classes, matcher, weight_dict, eos_coef, losses):
        self.num_classes = num_classes
        self.matcher = matcher
        self.weight_dict = weight_dict
        self.eos_coef = eos_coef
        self.losses = losses
        ew = jnp.ones((num_classes + 1,), jnp.float32)
        self.empty_weight = ew.at[-1].set(eos_coef)

    def _get_src_permutation_idx(self, indices):
        batch_idx = jnp.concatenate(
            [jnp.full_like(src, i) for i, (src, _) in enumerate(indices)])
        src_idx = jnp.concatenate([src for src, _ in indices])
        return batch_idx, src_idx

    def forward(self, outputs, targets):
        outputs_without_aux = {k: v for k, v in outputs.items() if k != "aux_outputs"}
        indices = self.matcher(outputs_without_aux, targets)
        num_boxes = float(max(sum(len(t["labels"]) for t in targets), 1))
        # TODO(synk): distributed all-reduce of num_boxes (torch.distributed) omitted.

        src_logits = outputs["pred_logits"]                 # (B, Q, C+1)
        B, Q, C1 = src_logits.shape
        batch_idx, src_idx = self._get_src_permutation_idx(indices)
        target_classes_o = jnp.concatenate(
            [t["labels"][J] for t, (_, J) in zip(targets, indices)])
        target_classes = jnp.full((B, Q), self.num_classes, dtype=jnp.int32)
        target_classes = target_classes.at[batch_idx, src_idx].set(
            target_classes_o.astype(jnp.int32))

        want_labels = "labels" in self.losses
        want_boxes = "boxes" in self.losses
        # TODO(synk): boxes_3d / boxes_3d_sep smooth-L1 losses not implemented in the kernel.

        if want_boxes:
            src_boxes = outputs["pred_boxes"][batch_idx, src_idx]        # (N, 4)
            target_boxes = jnp.concatenate(
                [t["boxes"][i] for t, (_, i) in zip(targets, indices)], axis=0)
        else:
            src_boxes = jnp.zeros((0, 4), jnp.float32)
            target_boxes = jnp.zeros((0, 4), jnp.float32)

        loss_ce, l1_sum, giou_sum = detr_losses_fused(
            src_logits.reshape(B * Q, C1),
            target_classes.reshape(B * Q),
            self.empty_weight,
            src_boxes, target_boxes)

        losses = {}
        if want_labels:
            losses["loss_ce"] = loss_ce
            # class_error (log path): pure indexing glue, stays in plain JAX.
            matched_logits = src_logits[batch_idx, src_idx]              # (N, C+1)
            pred = jnp.argmax(matched_logits, axis=-1)
            acc = jnp.mean((pred == target_classes_o).astype(jnp.float32)) * 100.0
            losses["class_error"] = 100.0 - acc
        if want_boxes:
            losses["loss_bbox"] = l1_sum / num_boxes
            losses["loss_giou"] = giou_sum / num_boxes
        return losses

    __call__ = forward


# ---------------------------------------------------------------------------
# Pure-JAX reference (identity matching) used only for the self-check
# ---------------------------------------------------------------------------
def _reference_losses(pred_logits, pred_boxes, targets, num_classes, eos_coef):
    B, Q, C1 = pred_logits.shape
    ew = jnp.ones((C1,), jnp.float32).at[-1].set(eos_coef)
    tc = jnp.full((B, Q), num_classes, jnp.int32)
    sb, tb = [], []
    for b, t in enumerate(targets):
        n = int(t["labels"].shape[0])
        tc = tc.at[b, :n].set(t["labels"].astype(jnp.int32))
        sb.append(pred_boxes[b, :n])
        tb.append(t["boxes"])
    src_b = jnp.concatenate(sb, axis=0).astype(jnp.float32)
    tgt_b = jnp.concatenate(tb, axis=0).astype(jnp.float32)
    num_boxes = float(max(sum(int(t["labels"].shape[0]) for t in targets), 1))

    logits2d = pred_logits.reshape(B * Q, C1).astype(jnp.float32)
    tgt = tc.reshape(B * Q)
    logp = jax.nn.log_softmax(logits2d, axis=-1)
    nll = -jnp.take_along_axis(logp, tgt[:, None], axis=-1)[:, 0]
    w = ew[tgt]
    loss_ce = jnp.sum(w * nll) / jnp.sum(w)

    loss_bbox = jnp.sum(jnp.abs(src_b - tgt_b)) / num_boxes

    def xyxy(b):
        return jnp.stack([b[:, 0] - 0.5 * b[:, 2], b[:, 1] - 0.5 * b[:, 3],
                          b[:, 0] + 0.5 * b[:, 2], b[:, 1] + 0.5 * b[:, 3]], axis=-1)

    s, t = xyxy(src_b), xyxy(tgt_b)
    area_s = (s[:, 2] - s[:, 0]) * (s[:, 3] - s[:, 1])
    area_t = (t[:, 2] - t[:, 0]) * (t[:, 3] - t[:, 1])
    inter = (jnp.maximum(jnp.minimum(s[:, 2], t[:, 2]) - jnp.maximum(s[:, 0], t[:, 0]), 0.0)
             * jnp.maximum(jnp.minimum(s[:, 3], t[:, 3]) - jnp.maximum(s[:, 1], t[:, 1]), 0.0))
    union = area_s + area_t - inter
    iou = inter / union
    area_c = ((jnp.maximum(s[:, 2], t[:, 2]) - jnp.minimum(s[:, 0], t[:, 0]))
              * (jnp.maximum(s[:, 3], t[:, 3]) - jnp.minimum(s[:, 1], t[:, 1])))
    giou = iou - (area_c - union) / area_c
    loss_giou = jnp.sum(1.0 - giou) / num_boxes
    return loss_ce, loss_bbox, loss_giou


if __name__ == "__main__":
    key = jax.random.PRNGKey(0)
    B, Q, num_classes = 2, 8, 4
    k1, k2, kt = jax.random.split(key, 3)

    pred_logits = jax.random.normal(k1, (B, Q, num_classes + 1), jnp.float32)
    pred_boxes = jax.nn.sigmoid(jax.random.normal(k2, (B, Q, 4), jnp.float32))
    outputs = {"pred_logits": pred_logits, "pred_boxes": pred_boxes}

    n_targets = [3, 2]
    targets = []
    for b in range(B):
        kl, kb, kt = jax.random.split(kt, 3)
        labels = jax.random.randint(kl, (n_targets[b],), 0, num_classes, dtype=jnp.int32)
        boxes = jax.nn.sigmoid(jax.random.normal(kb, (n_targets[b], 4), jnp.float32)) * 0.4 + 0.1
        targets.append({"labels": labels, "boxes": boxes})

    criterion = SetCriterion(
        num_classes=num_classes,
        matcher=IdentityMatcher(),
        weight_dict={"loss_ce": 1.0, "loss_bbox": 5.0, "loss_giou": 2.0},
        eos_coef=0.1,
        losses=["labels", "boxes"],
    )

    losses = criterion(outputs, targets)
    for v in losses.values():
        jax.block_until_ready(v)

    ref_ce, ref_bbox, ref_giou = _reference_losses(
        pred_logits, pred_boxes, targets, num_classes, criterion.eos_coef)
    assert jnp.allclose(losses["loss_ce"], ref_ce, rtol=2e-3, atol=1e-4), (losses["loss_ce"], ref_ce)
    assert jnp.allclose(losses["loss_bbox"], ref_bbox, rtol=2e-3, atol=1e-4), (losses["loss_bbox"], ref_bbox)
    assert jnp.allclose(losses["loss_giou"], ref_giou, rtol=2e-3, atol=1e-4), (losses["loss_giou"], ref_giou)

    print("KERNEL_OK")
</pallas_src>

<mosaic_0001>
module attributes {stable_mosaic.version = 11 : i64} {
  func.func @kernel(%arg0: i32, %arg1: memref<8x5xf32, #tpu.memory_space<vmem>>, %arg2: memref<8x8xf32, #tpu.memory_space<vmem>>, %arg3: memref<8x128xf32, #tpu.memory_space<vmem>>, %arg4: memref<8x128xf32, #tpu.memory_space<vmem>>) attributes {dimension_semantics = [#tpu.dimension_semantics<parallel>], iteration_bounds = array<i64: 2>, scalar_prefetch = 0 : i64, scratch_operands = 0 : i64, tpu.core_type = #tpu.core_type<tc>, window_params = [{transform_indices = @transform_0, window_bounds = array<i64: 8, 5>}, {transform_indices = @transform_1, window_bounds = array<i64: 8, 8>}, {pipeline_mode = #tpu.pipeline_mode<synchronous>, transform_indices = @transform_2, window_bounds = array<i64: 8, 128>}, {transform_indices = @transform_3, window_bounds = array<i64: 8, 128>}]} {
    %c0 = arith.constant 0 : index
    %c0_0 = arith.constant 0 : index
    %0 = vector.load %arg1[%c0, %c0_0] : memref<8x5xf32, #tpu.memory_space<vmem>>, vector<8x5xf32>
    %c0_1 = arith.constant 0 : index
    %c0_2 = arith.constant 0 : index
    %1 = vector.load %arg2[%c0_1, %c0_2] : memref<8x8xf32, #tpu.memory_space<vmem>>, vector<8x1xf32>
    %c0_3 = arith.constant 0 : index
    %c1 = arith.constant 1 : index
    %2 = vector.load %arg2[%c0_3, %c1] : memref<8x8xf32, #tpu.memory_space<vmem>>, vector<8x1xf32>
    %3 = tpu.iota {dimensions = array<i32: 0>} : vector<8x1xi32>
    %c8_i32 = arith.constant 8 : i32
    %4 = arith.muli %arg0, %c8_i32 : i32
    %5 = vector.broadcast %4 : i32 to vector<8x1xi32>
    %6 = arith.addi %3, %5 : vector<8x1xi32>
    %c16_i32 = arith.constant 16 : i32
    %7 = vector.broadcast %c16_i32 : i32 to vector<8x1xi32>
    %8 = arith.cmpi slt, %6, %7 : vector<8x1xi32>
    %9 = tpu.iota {dimensions = array<i32: 1>} : vector<8x5xi32>
    %10 = arith.fptosi %1 : vector<8x1xf32> to vector<8x1xi32>
    %11 = vector.broadcast %10 : vector<8x1xi32> to vector<8x5xi32>
    %12 = arith.cmpi eq, %9, %11 : vector<8x5xi32>
    %13 = vector.broadcast %8 : vector<8x1xi1> to vector<8x5xi1>
    %14 = arith.andi %12, %13 : vector<8x5xi1>
    %cst = arith.constant dense<0xFF800000> : vector<8xf32>
    %15 = vector.multi_reduction <maximumf>, %0, %cst [1] : vector<8x5xf32> to vector<8xf32>
    %16 = vector.shape_cast %15 : vector<8xf32> to vector<8x1xf32>
    %17 = vector.broadcast %16 : vector<8x1xf32> to vector<8x5xf32>
    %18 = arith.subf %0, %17 : vector<8x5xf32>
    %19 = math.exp %18 : vector<8x5xf32>
    %cst_4 = arith.constant dense<0.000000e+00> : vector<8xf32>
    %20 = vector.multi_reduction <add>, %19, %cst_4 [1] : vector<8x5xf32> to vector<8xf32>
    %21 = vector.shape_cast %20 : vector<8xf32> to vector<8x1xf32>
    %22 = math.log %21 : vector<8x1xf32>
    %23 = arith.addf %16, %22 : vector<8x1xf32>
    %24 = arith.mulf %2, %23 : vector<8x1xf32>
    %cst_5 = arith.constant 0.000000e+00 : f32
    %25 = vector.broadcast %cst_5 : f32 to vector<8x1xf32>
    %26 = arith.select %8, %24, %25 : vector<8x1xi1>, vector<8x1xf32>
    %cst_6 = arith.constant 0.000000e+00 : f32
    %27 = vector.broadcast %cst_6 : f32 to vector<8x1xf32>
    %28 = arith.select %8, %2, %27 : vector<8x1xi1>, vector<8x1xf32>
    %29 = vector.broadcast %2 : vector<8x1xf32> to vector<8x5xf32>
    %30 = arith.mulf %29, %0 : vector<8x5xf32>
    %cst_7 = arith.constant 0.000000e+00 : f32
    %31 = vector.broadcast %cst_7 : f32 to vector<8x5xf32>
    %32 = arith.select %14, %30, %31 : vector<8x5xi1>, vector<8x5xf32>
    %cst_8 = arith.constant dense<0.000000e+00> : vector<5xf32>
    %33 = vector.multi_reduction <add>, %32, %cst_8 [0] : vector<8x5xf32> to vector<5xf32>
    %34 = vector.shape_cast %33 : vector<5xf32> to vector<1x5xf32>
    %cst_9 = arith.constant dense<0.000000e+00> : vector<1xf32>
    %35 = vector.multi_reduction <add>, %26, %cst_9 [0] : vector<8x1xf32> to vector<1xf32>
    %36 = vector.shape_cast %35 : vector<1xf32> to vector<1x1xf32>
    %cst_10 = arith.constant dense<0.000000e+00> : vector<1xf32>
    %37 = vector.multi_reduction <add>, %34, %cst_10 [1] : vector<1x5xf32> to vector<1xf32>
    %38 = vector.shape_cast %37 : vector<1xf32> to vector<1x1xf32>
    %39 = arith.subf %36, %38 : vector<1x1xf32>
    %cst_11 = arith.constant dense<0.000000e+00> : vector<1xf32>
    %40 = vector.multi_reduction <add>, %28, %cst_11 [0] : vector<8x1xf32> to vector<1xf32>
    %41 = vector.shape_cast %40 : vector<1xf32> to vector<1x1xf32>
    %42 = tpu.iota {dimensions = array<i32: 1>} : vector<8x128xi32>
    %43 = tpu.iota {dimensions = array<i32: 0>} : vector<8x128xi32>
    %c0_i32 = arith.constant 0 : i32
    %44 = vector.broadcast %c0_i32 : i32 to vector<8x128xi32>
    %45 = arith.cmpi eq, %43, %44 : vector<8x128xi32>
    %c0_i32_12 = arith.constant 0 : i32
    %46 = vector.broadcast %c0_i32_12 : i32 to vector<8x128xi32>
    %47 = arith.cmpi eq, %42, %46 : vector<8x128xi32>
    %48 = arith.andi %45, %47 : vector<8x128xi1>
    %cst_13 = arith.constant 0.000000e+00 : f32
    %49 = vector.shape_cast %39 : vector<1x1xf32> to vector<1x1xf32>
    %50 = vector.broadcast %49 : vector<1x1xf32> to vector<8x128xf32>
    %51 = vector.broadcast %cst_13 : f32 to vector<8x128xf32>
    %52 = arith.select %48, %50, %51 : vector<8x128xi1>, vector<8x128xf32>
    %c1_i32 = arith.constant 1 : i32
    %53 = vector.broadcast %c1_i32 : i32 to vector<8x128xi32>
    %54 = arith.cmpi eq, %42, %53 : vector<8x128xi32>
    %55 = arith.andi %45, %54 : vector<8x128xi1>
    %cst_14 = arith.constant 0.000000e+00 : f32
    %56 = vector.shape_cast %41 : vector<1x1xf32> to vector<1x1xf32>
    %57 = vector.broadcast %56 : vector<1x1xf32> to vector<8x128xf32>
    %58 = vector.broadcast %cst_14 : f32 to vector<8x128xf32>
    %59 = arith.select %55, %57, %58 : vector<8x128xi1>, vector<8x128xf32>
    %60 = arith.addf %52, %59 : vector<8x128xf32>
    %c0_15 = arith.constant 0 : index
    %c0_16 = arith.constant 0 : index
    %61 = vector.load %arg4[%c0_15, %c0_16] : memref<8x128xf32, #tpu.memory_space<vmem>>, vector<8x128xf32>
    tpu.vector_store %arg4[%c0_15, %c0_16], %60 {strides = array<i32>} : memref<8x128xf32, #tpu.memory_space<vmem>>, vector<8x128xf32>,
    %c0_i32_17 = arith.constant 0 : i32
    %62 = arith.cmpi eq, %arg0, %c0_i32_17 : i32
    %63 = arith.extui %62 : i1 to i32
    %c0_i32_18 = arith.constant 0 : i32
    %64 = arith.cmpi ne, %63, %c0_i32_18 : i32
    scf.if %64 {
      %c0_19 = arith.constant 0 : index
      %c0_20 = arith.constant 0 : index
      %65 = vector.load %arg3[%c0_19, %c0_20] : memref<8x128xf32, #tpu.memory_space<vmem>>, vector<8x128xf32>
      %66 = tpu.iota {dimensions = array<i32: 1>} : vector<1x128xi32>
      %c5_i32 = arith.constant 5 : i32
      %67 = vector.broadcast %c5_i32 : i32 to vector<1x128xi32>
      %68 = arith.cmpi slt, %66, %67 : vector<1x128xi32>
      %69 = vector.extract_strided_slice %65 {offsets = [0, 0], sizes = [1, 128], strides = [1, 1]} : vector<8x128xf32> to vector<1x128xf32>
      %70 = vector.extract_strided_slice %65 {offsets = [1, 0], sizes = [1, 128], strides = [1, 1]} : vector<8x128xf32> to vector<1x128xf32>
      %71 = vector.extract_strided_slice %65 {offsets = [2, 0], sizes = [1, 128], strides = [1, 1]} : vector<8x128xf32> to vector<1x128xf32>
      %72 = vector.extract_strided_slice %65 {offsets = [3, 0], sizes = [1, 128], strides = [1, 1]} : vector<8x128xf32> to vector<1x128xf32>
      %73 = vector.extract_strided_slice %65 {offsets = [4, 0], sizes = [1, 128], strides = [1, 1]} : vector<8x128xf32> to vector<1x128xf32>
      %74 = vector.extract_strided_slice %65 {offsets = [5, 0], sizes = [1, 128], strides = [1, 1]} : vector<8x128xf32> to vector<1x128xf32>
      %75 = vector.extract_strided_slice %65 {offsets = [6, 0], sizes = [1, 128], strides = [1, 1]} : vector<8x128xf32> to vector<1x128xf32>
      %76 = vector.extract_strided_slice %65 {offsets = [7, 0], sizes = [1, 128], strides = [1, 1]} : vector<8x128xf32> to vector<1x128xf32>
      %77 = arith.subf %69, %73 : vector<1x128xf32>
      %78 = math.absf %77 : vector<1x128xf32>
      %79 = arith.subf %70, %74 : vector<1x128xf32>
      %80 = math.absf %79 : vector<1x128xf32>
      %81 = arith.addf %78, %80 : vector<1x128xf32>
      %82 = arith.subf %71, %75 : vector<1x128xf32>
      %83 = math.absf %82 : vector<1x128xf32>
      %84 = arith.addf %81, %83 : vector<1x128xf32>
      %85 = arith.subf %72, %76 : vector<1x128xf32>
      %86 = math.absf %85 : vector<1x128xf32>
      %87 = arith.addf %84, %86 : vector<1x128xf32>
      %cst_21 = arith.constant 0.000000e+00 : f32
      %88 = vector.broadcast %cst_21 : f32 to vector<1x128xf32>
      %89 = arith.select %68, %87, %88 : vector<1x128xi1>, vector<1x128xf32>
      %cst_22 = arith.constant dense<0.000000e+00> : vector<1xf32>
      %90 = vector.multi_reduction <add>, %89, %cst_22 [1] : vector<1x128xf32> to vector<1xf32>
      %91 = vector.shape_cast %90 : vector<1xf32> to vector<1x1xf32>
      %cst_23 = arith.constant 5.000000e-01 : f32
      %92 = vector.broadcast %cst_23 : f32 to vector<1x128xf32>
      %93 = arith.mulf %92, %71 : vector<1x128xf32>
      %94 = arith.subf %69, %93 : vector<1x128xf32>
      %cst_24 = arith.constant 5.000000e-01 : f32
      %95 = vector.broadcast %cst_24 : f32 to vector<1x128xf32>
      %96 = arith.mulf %95, %72 : vector<1x128xf32>
      %97 = arith.subf %70, %96 : vector<1x128xf32>
      %cst_25 = arith.constant 5.000000e-01 : f32
      %98 = vector.broadcast %cst_25 : f32 to vector<1x128xf32>
      %99 = arith.mulf %98, %71 : vector<1x128xf32>
      %100 = arith.addf %69, %99 : vector<1x128xf32>
      %cst_26 = arith.constant 5.000000e-01 : f32
      %101 = vector.broadcast %cst_26 : f32 to vector<1x128xf32>
      %102 = arith.mulf %101, %72 : vector<1x128xf32>
      %103 = arith.addf %70, %102 : vector<1x128xf32>
      %cst_27 = arith.constant 5.000000e-01 : f32
      %104 = vector.broadcast %cst_27 : f32 to vector<1x128xf32>
      %105 = arith.mulf %104, %75 : vector<1x128xf32>
      %106 = arith.subf %73, %105 : vector<1x128xf32>
      %cst_28 = arith.constant 5.000000e-01 : f32
      %107 = vector.broadcast %cst_28 : f32 to vector<1x128xf32>
      %108 = arith.mulf %107, %76 : vector<1x128xf32>
      %109 = arith.subf %74, %108 : vector<1x128xf32>
      %cst_29 = arith.constant 5.000000e-01 : f32
      %110 = vector.broadcast %cst_29 : f32 to vector<1x128xf32>
      %111 = arith.mulf %110, %75 : vector<1x128xf32>
      %112 = arith.addf %73, %111 : vector<1x128xf32>
      %cst_30 = arith.constant 5.000000e-01 : f32
      %113 = vector.broadcast %cst_30 : f32 to vector<1x128xf32>
      %114 = arith.mulf %113, %76 : vector<1x128xf32>
      %115 = arith.addf %74, %114 : vector<1x128xf32>
      %116 = arith.subf %100, %94 : vector<1x128xf32>
      %117 = arith.subf %103, %97 : vector<1x128xf32>
      %118 = arith.mulf %116, %117 : vector<1x128xf32>
      %119 = arith.subf %112, %106 : vector<1x128xf32>
      %120 = arith.subf %115, %109 : vector<1x128xf32>
      %121 = arith.mulf %119, %120 : vector<1x128xf32>
      %122 = arith.maximumf %94, %106 : vector<1x128xf32>
      %123 = arith.maximumf %97, %109 : vector<1x128xf32>
      %124 = arith.minimumf %100, %112 : vector<1x128xf32>
      %125 = arith.minimumf %103, %115 : vector<1x128xf32>
      %126 = arith.subf %124, %122 : vector<1x128xf32>
      %cst_31 = arith.constant 0.000000e+00 : f32
      %127 = vector.broadcast %cst_31 : f32 to vector<1x128xf32>
      %128 = arith.maximumf %126, %127 : vector<1x128xf32>
      %129 = arith.subf %125, %123 : vector<1x128xf32>
      %cst_32 = arith.constant 0.000000e+00 : f32
      %130 = vector.broadcast %cst_32 : f32 to vector<1x128xf32>
      %131 = arith.maximumf %129, %130 : vector<1x128xf32>
      %132 = arith.mulf %128, %131 : vector<1x128xf32>
      %133 = arith.addf %118, %121 : vector<1x128xf32>
      %134 = arith.subf %133, %132 : vector<1x128xf32>
      %cst_33 = arith.constant 1.000000e+00 : f32
      %135 = vector.broadcast %cst_33 : f32 to vector<1x128xf32>
      %136 = arith.select %68, %134, %135 : vector<1x128xi1>, vector<1x128xf32>
      %137 = arith.divf %132, %136 : vector<1x128xf32>
      %138 = arith.minimumf %94, %106 : vector<1x128xf32>
      %139 = arith.minimumf %97, %109 : vector<1x128xf32>
      %140 = arith.maximumf %100, %112 : vector<1x128xf32>
      %141 = arith.maximumf %103, %115 : vector<1x128xf32>
      %142 = arith.subf %140, %138 : vector<1x128xf32>
      %143 = arith.subf %141, %139 : vector<1x128xf32>
      %144 = arith.mulf %142, %143 : vector<1x128xf32>
      %145 = arith.subf %144, %134 : vector<1x128xf32>
      %cst_34 = arith.constant 1.000000e+00 : f32
      %146 = vector.broadcast %cst_34 : f32 to vector<1x128xf32>
      %147 = arith.select %68, %144, %146 : vector<1x128xi1>, vector<1x128xf32>
      %148 = arith.divf %145, %147 : vector<1x128xf32>
      %149 = arith.subf %137, %148 : vector<1x128xf32>
      %cst_35 = arith.constant 1.000000e+00 : f32
      %150 = vector.broadcast %cst_35 : f32 to vector<1x128xf32>
      %151 = arith.subf %150, %149 : vector<1x128xf32>
      %cst_36 = arith.constant 0.000000e+00 : f32
      %152 = vector.broadcast %cst_36 : f32 to vector<1x128xf32>
      %153 = arith.select %68, %151, %152 : vector<1x128xi1>, vector<1x128xf32>
      %cst_37 = arith.constant dense<0.000000e+00> : vector<1xf32>
      %154 = vector.multi_reduction <add>, %153, %cst_37 [1] : vector<1x128xf32> to vector<1xf32>
      %155 = vector.shape_cast %154 : vector<1xf32> to vector<1x1xf32>
      %c0_38 = arith.constant 0 : index
      %c0_39 = arith.constant 0 : index
      %156 = vector.load %arg4[%c0_38, %c0_39] : memref<8x128xf32, #tpu.memory_space<vmem>>, vector<8x128xf32>
      %c2_i32 = arith.constant 2 : i32
      %157 = vector.broadcast %c2_i32 : i32 to vector<8x128xi32>
      %158 = arith.cmpi eq, %42, %157 : vector<8x128xi32>
      %159 = arith.andi %45, %158 : vector<8x128xi1>
      %cst_40 = arith.constant 0.000000e+00 : f32
      %160 = vector.shape_cast %91 : vector<1x1xf32> to vector<1x1xf32>
      %161 = vector.broadcast %160 : vector<1x1xf32> to vector<8x128xf32>
      %162 = vector.broadcast %cst_40 : f32 to vector<8x128xf32>
      %163 = arith.select %159, %161, %162 : vector<8x128xi1>, vector<8x128xf32>
      %164 = arith.addf %156, %163 : vector<8x128xf32>
      %c3_i32 = arith.constant 3 : i32
      %165 = vector.broadcast %c3_i32 : i32 to vector<8x128xi32>
      %166 = arith.cmpi eq, %42, %165 : vector<8x128xi32>
      %167 = arith.andi %45, %166 : vector<8x128xi1>
      %cst_41 = arith.constant 0.000000e+00 : f32
      %168 = vector.shape_cast %155 : vector<1x1xf32> to vector<1x1xf32>
      %169 = vector.broadcast %168 : vector<1x1xf32> to vector<8x128xf32>
      %170 = vector.broadcast %cst_41 : f32 to vector<8x128xf32>
      %171 = arith.select %167, %169, %170 : vector<8x128xi1>, vector<8x128xf32>
      %172 = arith.addf %164, %171 : vector<8x128xf32>
      %c0_42 = arith.constant 0 : index
      %c0_43 = arith.constant 0 : index
      %173 = vector.load %arg4[%c0_42, %c0_43] : memref<8x128xf32, #tpu.memory_space<vmem>>, vector<8x128xf32>
      tpu.vector_store %arg4[%c0_42, %c0_43], %172 {strides = array<i32>} : memref<8x128xf32, #tpu.memory_space<vmem>>, vector<8x128xf32>,
    } else {
    }
    return
  }
  func.func @transform_0(%arg0: i32) -> (i32, i32) {
    %c0_i32 = arith.constant 0 : i32
    %c0_i32_0 = arith.constant 0 : i32
    return %arg0, %c0_i32 : i32, i32
  }
  func.func @transform_1(%arg0: i32) -> (i32, i32) {
    %c0_i32 = arith.constant 0 : i32
    %c0_i32_0 = arith.constant 0 : i32
    return %arg0, %c0_i32 : i32, i32
  }
  func.func @transform_2(%arg0: i32) -> (i32, i32) {
    %c0_i32 = arith.constant 0 : i32
    %c0_i32_0 = arith.constant 0 : i32
    %c0_i32_1 = arith.constant 0 : i32
    return %c0_i32, %c0_i32_0 : i32, i32
  }
  func.func @transform_3(%arg0: i32) -> (i32, i32) {
    %c0_i32 = arith.constant 0 : i32
    %c0_i32_0 = arith.constant 0 : i32
    return %arg0, %c0_i32 : i32, i32
  }
}

</mosaic_0001>

<llo_original>
// kernel: tpu_custom_call.1
$region0: #{tpu_custom_call.1}
  #allocation0 [shape = 'u32[]', space=smem, size = 0x4, offset = 0x4, fixed_abs, tag = 'smem constant byte address 0x4 - core index']
  #allocation1 [shape = 'u32[144,128]{1,0:T(1,128)}', space=vmem, size = 0x12000, scoped, tag = 'internal scratch']
  %s0 = inlined_call_operand.vmem [shape: f32[16,5], index: 0, kind: input, shape index: {}]
  %s1 = inlined_call_operand.vmem [shape: f32[16,8], index: 1, kind: input, shape index: {}]
  %s2 = inlined_call_operand.vmem [shape: f32[8,128], index: 2, kind: input, shape index: {}]
  %s3 = inlined_call_operand.hbm [shape: f32[16,128], index: 3, kind: output, shape index: {}]
  %s4 = sld [smem:[#allocation0]]
  $region49: #{tpu_custom_call.1} parent=0
    _
  %s6 = ssub.s32 1, %s4
  %s7 = scalar_select 0, %s6, %s4
  $region1: #{tpu_custom_call.1} parent=0
    #allocation2 [shape = 'u8[8192]{0}', space=vmem, size = 0x2000, scoped, tag = 'output window, operand 0']
    #allocation3 [shape = 's32[2]{0}', space=sflag, size = 0x8, scoped, tag = 'scoped memory for tpu_custom_call.1']
    %8 = vsyncpa [#allocation3], 0
    %s9 = scalar_lea.sflag [#allocation3], 1
    %10 = vsyncpa %s9, 0
    loop: start=0, step=1, limit=4
    $region2: #{tpu_custom_call.1} parent=1 // loop_pre_header
      _
    $region3: #{tpu_custom_call.1} parent=1 // loop_header
      %s12 = sphi 0, %s16
      %p13 = scmp.ge.s32.totalorder %s12, 4
      %s22 = sphi 0, %s24
      %s25 = sphi 0, %s22
      %s26 = sphi 0, %s25
      %s42 = sphi 0, %s26
      %s48 = sphi 0, %s50
      %s51 = sphi 0, %s48
      %s52 = sphi 0, %s51
      %s68 = sphi 0, %s52
      %s72 = sphi 0, %s72
      %s74 = sphi 0, %s72
      %s75 = sphi 0, %s74
      %s89 = sphi 0, %s75
      %s95 = sphi 0, %s97
      %s98 = sphi 0, %s95
      %s99 = sphi 0, %s98
      %s115 = sphi 0, %s99
    $region4: #{tpu_custom_call.1} parent=1 // loop_header_branch
      %15 = sbr.rel (%p13) target = $region8
    $region5: #{tpu_custom_call.1} parent=1 // loop_body
      %s17 = ssub.s32 %s12, 1
      %s18 = ssub.s32 %s12, 2
      %s19 = sadd.s32 %s12, 1
      %s20 = ssub.s32 %s12, %s19
      %p21 = scmp.eq.s32.totalorder %s20, 0
      %s23 = sadd.s32 %s22, 1
      %s24 = scalar_select %p21, %s22, %s23
      %p27 = pneg %p21
      %p28 = scmp.eq.s32.totalorder %s12, 1
      %p29 = por %p27, %p28
      %p30 = scmp.ne.s32.totalorder %s22, %s25
      %p31 = scmp.eq.s32.totalorder %s12, 0
      %p32 = por %p30, %p31
      %p33 = scmp.ne.s32.totalorder %s22, %s25
      %p34 = scmp.eq.s32.totalorder %s17, 1
      %p35 = por %p33, %p34
      %p36 = scmp.ne.s32.totalorder %s25, %s26
      %p37 = scmp.eq.s32.totalorder %s17, 0
      %p38 = por %p36, %p37
      %p39 = scmp.ne.s32.totalorder %s25, %s26
      %p40 = scmp.eq.s32.totalorder %s18, 1
      %p41 = por %p39, %p40
      %p43 = scmp.ne.s32.totalorder %s26, %s42
      %p44 = scmp.eq.s32.totalorder %s18, 0
      %p45 = por %p43, %p44
      %s46 = ssub.s32 %s12, %s19
      %p47 = scmp.eq.s32.totalorder %s46, 0
      %s49 = sadd.s32 %s48, 1
      %s50 = scalar_select %p47, %s48, %s49
      %p53 = pneg %p47
      %p54 = scmp.eq.s32.totalorder %s12, 1
      %p55 = por %p53, %p54
      %p56 = scmp.ne.s32.totalorder %s48, %s51
      %p57 = scmp.eq.s32.totalorder %s12, 0
      %p58 = por %p56, %p57
      %p59 = scmp.ne.s32.totalorder %s48, %s51
      %p60 = scmp.eq.s32.totalorder %s17, 1
      %p61 = por %p59, %p60
      %p62 = scmp.ne.s32.totalorder %s51, %s52
      %p63 = scmp.eq.s32.totalorder %s17, 0
      %p64 = por %p62, %p63
      %p65 = scmp.ne.s32.totalorder %s51, %s52
      %p66 = scmp.eq.s32.totalorder %s18, 1
      %p67 = por %p65, %p66
      %p69 = scmp.ne.s32.totalorder %s52, %s68
      %p70 = scmp.eq.s32.totalorder %s18, 0
      %p71 = por %p69, %p70
      %s73 = sadd.s32 %s72, 1
      %p76 = scmp.eq.s32.totalorder %s12, 1
      %p77 = scmp.ne.s32.totalorder %s72, %s74
      %p78 = scmp.eq.s32.totalorder %s12, 0
      %p79 = por %p77, %p78
      %p80 = scmp.ne.s32.totalorder %s72, %s74
      %p81 = scmp.eq.s32.totalorder %s17, 1
      %p82 = por %p80, %p81
      %p83 = scmp.ne.s32.totalorder %s74, %s75
      %p84 = scmp.eq.s32.totalorder %s17, 0
      %p85 = por %p83, %p84
      %p86 = scmp.ne.s32.totalorder %s74, %s75
      %p87 = scmp.eq.s32.totalorder %s18, 1
      %p88 = por %p86, %p87
      %p90 = scmp.ne.s32.totalorder %s75, %s89
      %p91 = scmp.eq.s32.totalorder %s18, 0
      %p92 = por %p90, %p91
      %s93 = ssub.s32 %s12, %s19
      %p94 = scmp.eq.s32.totalorder %s93, 0
      %s96 = sadd.s32 %s95, 1
      %s97 = scalar_select %p94, %s95, %s96
      %p100 = pneg %p94
      %p101 = scmp.eq.s32.totalorder %s12, 1
      %p102 = por %p100, %p101
      %p103 = scmp.ne.s32.totalorder %s95, %s98
      %p104 = scmp.eq.s32.totalorder %s12, 0
      %p105 = por %p103, %p104
      %p106 = scmp.ne.s32.totalorder %s95, %s98
      %p107 = scmp.eq.s32.totalorder %s17, 1
      %p108 = por %p106, %p107
      %p109 = scmp.ne.s32.totalorder %s98, %s99
      %p110 = scmp.eq.s32.totalorder %s17, 0
      %p111 = por %p109, %p110
      %p112 = scmp.ne.s32.totalorder %s98, %s99
      %p113 = scmp.eq.s32.totalorder %s18, 1
      %p114 = por %p112, %p113
      %p116 = scmp.ne.s32.totalorder %s99, %s115
      %p117 = scmp.eq.s32.totalorder %s18, 0
      %p118 = por %p116, %p117
      %p119 = scmp.le.s32.totalorder 1, %s12
      %p120 = scmp.lt.s32.totalorder %s12, 3
      %p121 = pnand %p119, %p120
      %p122 = pneg %p121
      // Predicated region
      $region9: #{tpu_custom_call.1} parent=5 // pred_check
        _
      $region10: #{tpu_custom_call.1} parent=5 // pred_check_branch
        %124 = sbr.rel (%p121) target = $region12
      $region11: #{tpu_custom_call.1} parent=5 // pred_region
        %s125 = ssub.s32 %s12, 1
        // Predicated region
        $region13: #{tpu_custom_call.1} parent=11 // pred_check
          %p126 = pneg %p85
        $region14: #{tpu_custom_call.1} parent=11 // pred_check_branch
          %128 = sbr.rel (%p126) target = $region16
        $region15: #{tpu_custom_call.1} parent=11 // pred_region
          _
        $region16: #{tpu_custom_call.1} parent=11 // pred_fallthru
          _
      $region12: #{tpu_custom_call.1} parent=5 // pred_fallthru
        _
      %p129 = scmp.lt.s32.totalorder %s12, 2
      // Predicated region
      $region17: #{tpu_custom_call.1} parent=5 // pred_check
        %p130 = pneg %p129
      $region18: #{tpu_custom_call.1} parent=5 // pred_check_branch
        %132 = sbr.rel (%p130) target = $region20
      $region19: #{tpu_custom_call.1} parent=5 // pred_region
        // Predicated region
        $region21: #{tpu_custom_call.1} parent=19 // pred_check
          %p133 = pneg %p32
        $region22: #{tpu_custom_call.1} parent=19 // pred_check_branch
          %135 = sbr.rel (%p133) target = $region24
        $region23: #{tpu_custom_call.1} parent=19 // pred_region
          %p136 = scmp.lt.s32.totalorder %s12, 1
          %s137 = scalar_select %p136, %s12, 1
          %s138 = smul.addr %s137, 8
          %s139 = scalar_lea.vmem %s0, %s138
        $region24: #{tpu_custom_call.1} parent=19 // pred_fallthru
          _
        // Predicated region
        $region25: #{tpu_custom_call.1} parent=19 // pred_check
          %p140 = pneg %p58
        $region26: #{tpu_custom_call.1} parent=19 // pred_check_branch
          %142 = sbr.rel (%p140) target = $region28
        $region27: #{tpu_custom_call.1} parent=19 // pred_region
          %p143 = scmp.lt.s32.totalorder %s12, 1
          %s144 = scalar_select %p143, %s12, 1
          %s145 = smul.addr %s144, 8
          %s146 = scalar_lea.vmem %s1, %s145
        $region28: #{tpu_custom_call.1} parent=19 // pred_fallthru
          _
      $region20: #{tpu_custom_call.1} parent=5 // pred_fallthru
        _
      %p147 = scmp.le.s32.totalorder 1, %s12
      %p148 = scmp.lt.s32.totalorder %s12, 3
      %p149 = pnand %p147, %p148
      %p150 = pneg %p149
      // Predicated region
      $region29: #{tpu_custom_call.1} parent=5 // pred_check
        _
      $region30: #{tpu_custom_call.1} parent=5 // pred_check_branch
        %152 = sbr.rel (%p149) target = $region32
      $region31: #{tpu_custom_call.1} parent=5 // pred_region
        %s153 = ssub.s32 %s12, 1
        %p154 = scmp.lt.s32.totalorder %s17, 1
        %s155 = scalar_select %p154, %s17, 1
        %s156 = smul.addr %s155, 8
        %s157 = scalar_lea.vmem %s0, %s156
        %p158 = pneg %p38
        %p159 = pneg %p35
        %p160 = scmp.lt.s32.totalorder %s17, 1
        %s161 = scalar_select %p160, %s17, 1
        %s162 = smul.addr %s161, 8
        %s163 = scalar_lea.vmem %s1, %s162
        %p164 = pneg %p64
        %p165 = pneg %p61
        %p166 = pneg %p85
        %p167 = pneg %p82
        %p168 = pneg %p111
        %p169 = pneg %p108
        %s170 = sand.u32 %s98, 1
        %s171 = scalar_lea.sflag [#allocation3], %s170
        %s172 = sand.u32 %s98, 1
        %s173 = smul.addr %s172, 8
        %s174 = scalar_lea.vmem [#allocation2], %s173
        %p175 = scmp.lt.s32.totalorder %s17, 1
        %s176 = scalar_select %p175, %s17, 1
        %s177 = smul.addr %s176, 8
        %s178 = scalar_lea.vmem %s0, %s177
        %p179 = scmp.lt.s32.totalorder %s17, 1
        %s180 = scalar_select %p179, %s17, 1
        %s181 = smul.addr %s180, 8
        %s182 = scalar_lea.vmem %s1, %s181
        %v183 = vld [vmem:[%s178] sm:$0xff]
        %v184 = vld [vmem:[%s182] sm:$0xff]
        %v185 = vlaneseq
        %v186 = vshrl.u32 %v185, 7
        %s187 = smul.u32 %s17, 8
        %v188 = vstv %s187
        %v189 = vadd.s32 %v186, %v188
        %vm190 = vcmp.lt.s32.totalorder %v189, 16
        %v191 = vlaneseq
        %v192 = vand.u32 %v191, 127
        %v193 = vcvt.f32.s32.to.zero.pseudo %v184
        %194 = vset.pattern.permute.xlu0 0
        %195 = vperm.xlu0 %194, %v193
        %v196 = vpop.permute.xlu0 %195
        %vm197 = vcmp.eq.s32.totalorder %v192, %v196
        %v198 = vsel %vm190, 1, 0
        %vm199 = vcmp.eq.s32.totalorder %v198, 1
        %vm200 = vmand %vm197, %vm199
        %vm201 = vcmask 39936
        %v202 = vsel %vm201, %v183, -inf
        %203 = vmax.xlane.f32.xlu0 %v202
        %v204 = vpop.xlane.xlu0 %203
        %v205 = vsub.f32 %v183, %v204
        %v206 = vmul.f32 %v205, 1.442695
        %v207 = vpow.pop %v206
        %v208 = vsel %vm201, %v207, 0.0
        %209 = vadd.xlane.f32.xlu0 %v208
        %v210 = vpop.xlane.xlu0 %209
        %v211 = vlog2.pop %v210
        %v212 = vmul.f32 %v211, 0.6931472
        %v213 = vadd.f32 %v204, %v212
        %v214 = vmul.f32 %v184, %v213
        %v215 = vsel %vm190, %v214, 0.0
        %v216 = vsel %vm190, %v184, 0.0
        %218 = vset.pattern.permute.xlu0 1
        %219 = vperm.xlu0 %218, %v184
        %v220 = vpop.permute.xlu0 %219
        %v222 = vmul.f32 %v220, %v183
        %v223 = vsel %vm200, %v222, 0.0
        %v224 = vsel %vm201, %v223, 0.0
        %v225 = vrot.slane %v224, 4
        %v226 = vadd.f32 %v224, %v225
        %v227 = vrot.slane %v226, 2
        %v228 = vadd.f32 %v226, %v227
        %v229 = vrot.slane %v228, 1
        %v230 = vadd.f32 %v228, %v229
        %vm231 = vcmask 15368
        %v232 = vsel %vm231, %v215, 0.0
        %v233 = vrot.slane %v232, 4
        %v234 = vadd.f32 %v232, %v233
        %v235 = vrot.slane %v234, 2
        %v236 = vadd.f32 %v234, %v235
        %v237 = vrot.slane %v236, 1
        %v238 = vadd.f32 %v236, %v237
        %v239 = vsel %vm201, %v230, 0.0
        %240 = vadd.xlane.f32.xlu0 %v239
        %v241 = vpop.xlane.xlu0 %240
        %v242 = vsub.f32 %v238, %v241
        %v243 = vsel %vm231, %v216, 0.0
        %v244 = vrot.slane %v243, 4
        %v245 = vadd.f32 %v243, %v244
        %v246 = vrot.slane %v245, 2
        %v247 = vadd.f32 %v245, %v246
        %v248 = vrot.slane %v247, 1
        %v249 = vadd.f32 %v247, %v248
        %vm250 = vcmp.eq.s32.totalorder %v186, 0
        %vm251 = vcmp.eq.s32.totalorder %v192, 0
        %vm252 = vmand %vm250, %vm251
        %254 = vset.pattern.permute.xlu0 1
        %255 = vperm.xlu0 %254, %v242
        %v256 = vpop.permute.xlu0 %255
        %v258 = vsel %vm252, %v256, 0.0
        %vm259 = vcmp.eq.s32.totalorder %v192, 1
        %vm260 = vmand %vm250, %vm259
        %262 = vset.pattern.permute.xlu0 1
        %263 = vperm.xlu0 %262, %v249
        %v264 = vpop.permute.xlu0 %263
        %v266 = vsel %vm260, %v264, 0.0
        %v267 = vadd.f32 %v258, %v266
        %268 = vst [vmem:[%s174] sm:$0xff] %v267
        %p269 = scmp.eq.s32.totalorder %s17, 0
        // Predicated region
        $region33: #{tpu_custom_call.1} parent=31 // pred_check
          %p270 = pneg %p269
        $region34: #{tpu_custom_call.1} parent=31 // pred_check_branch
          %272 = sbr.rel (%p270) target = $region36
        $region35: #{tpu_custom_call.1} parent=31 // pred_region
          %v273 = vld [vmem:[%s2] sm:$0xff]
          %vm274 = vcmp.lt.s32.totalorder %v192, 5
          %v276 = vrot.slane %v273, 4
          %v278 = vsub.f32 %v273, %v276
          %v279 = vand.u32 2147483647, %v278
          %v281 = vrot.slane %v279, 1
          %v283 = vadd.f32 %v279, %v281
          %v284 = vrot.slane %v279, 2
          %v286 = vadd.f32 %v283, %v284
          %v287 = vrot.slane %v279, 3
          %v289 = vadd.f32 %v286, %v287
          %v290 = vsel %vm274, %v289, 0.0
          %vm291 = vcmask 1040384
          %v292 = vsel %vm291, %v290, 0.0
          %293 = vadd.xlane.f32.xlu0 %v292
          %v294 = vpop.xlane.xlu0 %293
          %v295 = vmul.f32 %v273, 0.5
          %v297 = vrot.slane %v295, 2
          %v299 = vsub.f32 %v273, %v297
          %v300 = vadd.f32 %v273, %v297
          %v301 = vsub.f32 %v300, %v299
          %v303 = vrot.slane %v301, 1
          %v305 = vmul.f32 %v301, %v303
          %v307 = vrot.slane %v299, 4
          %v309 = vmax.f32 %v299, %v307
          %v311 = vrot.slane %v300, 4
          %v313 = vmin.f32 %v300, %v311
          %v314 = vsub.f32 %v313, %v309
          %v315 = vmax.f32 %v314, 0.0
          %v317 = vrot.slane %v315, 1
          %v319 = vmul.f32 %v315, %v317
          %v321 = vrot.slane %v305, 4
          %v323 = vadd.f32 %v305, %v321
          %v324 = vsub.f32 %v323, %v319
          %v325 = vsel %vm274, %v324, 1.0
          %v326 = vrcp.pop %v325
          %v327 = vmul.f32 %v319, %v326
          %v328 = vmin.f32 %v299, %v307
          %v329 = vmax.f32 %v300, %v311
          %v330 = vsub.f32 %v329, %v328
          %v332 = vrot.slane %v330, 1
          %v334 = vmul.f32 %v330, %v332
          %v335 = vsub.f32 %v334, %v324
          %v336 = vsel %vm274, %v334, 1.0
          %v337 = vrcp.pop %v336
          %v338 = vmul.f32 %v335, %v337
          %v339 = vsub.f32 %v327, %v338
          %v340 = vsub.f32 1.0, %v339
          %v341 = vsel %vm274, %v340, 0.0
          %v342 = vsel %vm291, %v341, 0.0
          %343 = vadd.xlane.f32.xlu0 %v342
          %v344 = vpop.xlane.xlu0 %343
          %v345 = vld [vmem:[%s174] sm:$0xff]
          %vm346 = vcmp.eq.s32.totalorder %v192, 2
          %vm347 = vmand %vm250, %vm346
          %v348 = vlaneseq
          %v349 = vshrl.u32 %v348, 7
          %v350 = vsub.s32 0, %v349
          %v351 = vrot.slane %v294, %v350
          %v352 = vsel %vm347, %v351, 0.0
          %v353 = vadd.f32 %v345, %v352
          %vm354 = vcmp.eq.s32.totalorder %v192, 3
          %vm355 = vmand %vm250, %vm354
          %v356 = vlaneseq
          %v357 = vshrl.u32 %v356, 7
          %v358 = vsub.s32 0, %v357
          %v359 = vrot.slane %v344, %v358
          %v360 = vsel %vm355, %v359, 0.0
          %v361 = vadd.f32 %v353, %v360
          %362 = vst [vmem:[%s174] sm:$0xff] %v361
        $region36: #{tpu_custom_call.1} parent=31 // pred_fallthru
          _
        %s363 = sand.u32 %s98, 1
        %s364 = scalar_lea.sflag [#allocation3], %s363
        %s365 = sand.u32 %s98, 1
        %s366 = smul.addr %s365, 8
        %s367 = scalar_lea.vmem [#allocation2], %s366
        // Predicated region
        $region37: #{tpu_custom_call.1} parent=31 // pred_check
          %p368 = pneg %p108
        $region38: #{tpu_custom_call.1} parent=31 // pred_check_branch
          %370 = sbr.rel (%p368) target = $region40
        $region39: #{tpu_custom_call.1} parent=31 // pred_region
          %s372 = ssub.s32 128, 128
          %373 = vsyncadd %s364, %s372
          %s374 = smul.addr %s17, 128
          %s375 = scalar_lea.hbm %s3, %s374
          %s377 = sshll.u32 %s367, 4
          %s378 = int_to_ptr.vmem [resolvable:$true] %s377
          %380 = dma.vmem_to_hbm [thread:$0]  %s378, 128, %s375, %s364
        $region40: #{tpu_custom_call.1} parent=31 // pred_fallthru
          _
      $region32: #{tpu_custom_call.1} parent=5 // pred_fallthru
        _
      %p381 = scmp.le.s32.totalorder 2, %s12
      // Predicated region
      $region41: #{tpu_custom_call.1} parent=5 // pred_check
        %p382 = pneg %p381
      $region42: #{tpu_custom_call.1} parent=5 // pred_check_branch
        %384 = sbr.rel (%p382) target = $region44
      $region43: #{tpu_custom_call.1} parent=5 // pred_region
        %s385 = ssub.s32 %s12, 2
        // Predicated region
        $region45: #{tpu_custom_call.1} parent=43 // pred_check
          %p386 = pneg %p114
        $region46: #{tpu_custom_call.1} parent=43 // pred_check_branch
          %388 = sbr.rel (%p386) target = $region48
        $region47: #{tpu_custom_call.1} parent=43 // pred_region
          %s389 = sand.u32 %s99, 1
          %s390 = scalar_lea.sflag [#allocation3], %s389
          %s391 = sand.u32 %s99, 1
          %s392 = smul.addr %s391, 8
          %s393 = scalar_lea.vmem [#allocation2], %s392
          %394 = dma.done %s390, 128
        $region48: #{tpu_custom_call.1} parent=43 // pred_fallthru
          _
      $region44: #{tpu_custom_call.1} parent=5 // pred_fallthru
        _
    $region6: #{tpu_custom_call.1} parent=1 // loop_footer
      %s16 = sadd.s32 1, %s12
    $region7: #{tpu_custom_call.1} parent=1 // loop_footer_branch
      %11 = sbr.rel target = $region3
    $region8: #{tpu_custom_call.1} parent=1 // loop_exit
      _
    %395 = vsyncpa [#allocation3], 1
    %s396 = scalar_lea.sflag [#allocation3], 1
    %397 = vsyncpa %s396, 1

</llo_original>
